<compile_context>
chip_gen: v7x
topology: tpu7x:2x2x1
jax: 0.10.0
libtpu: 0.0.40
codegen_flags: <defaults>
</compile_context>

<pallas_src>
import jax
import jax.numpy as jnp
from jax.experimental import pallas as pl
from jax.experimental.pallas import tpu as pltpu

HIDDEN = 16            # fc1 / fc2 width (fixed by the module)
LANE = 128             # TPU lane width
MAX_LANE_TILE = 8192   # upper bound on batch lanes per grid step


def _round_up(x, m):
    return (x + m - 1) // m * m


def _ddpg_actor_kernel(w1_ref, w2_ref, w3_ref, x_ref, out_ref):
    """One batch tile, batch on lanes.

    w1_ref : (AUGP, S_aug)  [W1 | b1] + row regenerating the ones channel
    w2_ref : (AUGP, AUGP)   [W2 | b2] + ones-channel passthrough
    w3_ref : (A_pad, AUGP)  [W3 | b3]; padded action rows hold -1e30 in bias col
    x_ref  : (S_aug, TB)    state rows 0..S-1, ones row at S, zeros after
    out_ref: (A_pad, TB)    softmax probs; padded rows come out ~0
    """
    x = x_ref[...]
    # fc1+relu, fc2+relu, fc3 -- biases folded into the matmuls (ones channel).
    h1 = jnp.maximum(jnp.dot(w1_ref[...], x, preferred_element_type=jnp.float32), 0.0)
    h2 = jnp.maximum(jnp.dot(w2_ref[...], h1, preferred_element_type=jnp.float32), 0.0)
    logits = jnp.dot(w3_ref[...], h2, preferred_element_type=jnp.float32)

    # Softmax over the action (sublane) axis; padded rows carry -1e30 -> ~0.
    m = jnp.max(logits, axis=0, keepdims=True)
    e = jnp.exp(logits - m)
    denom = jnp.sum(e, axis=0, keepdims=True)
    out_ref[...] = e * pl.reciprocal(denom, approx=False)


def _pack_params(params, S, A, S_aug, A_pad, augp):
    f32 = jnp.float32
    w1, b1 = params["w1"].astype(f32), params["b1"].astype(f32)
    w2, b2 = params["w2"].astype(f32), params["b2"].astype(f32)
    w3, b3 = params["w3"].astype(f32), params["b3"].astype(f32)
    H = HIDDEN
    one = H  # index of the constant-ones channel in the augmented hidden vector

    w1p = jnp.zeros((augp, S_aug), f32)
    w1p = w1p.at[:H, :S].set(w1).at[:H, S].set(b1).at[one, S].set(1.0)

    w2p = jnp.zeros((augp, augp), f32)
    w2p = w2p.at[:H, :H].set(w2).at[:H, one].set(b2).at[one, one].set(1.0)

    w3p = jnp.zeros((A_pad, augp), f32)
    w3p = w3p.at[:A, :H].set(w3).at[:A, one].set(b3)
    if A_pad > A:
        # Bake the padded-action mask into the bias column (finite sentinel).
        w3p = w3p.at[A:, one].set(-1e30)
    return w1p, w2p, w3p


def _choose_batch_tile(B, max_lane_tile):
    b_lane = _round_up(max(B, 1), LANE)
    n_steps = pl.cdiv(b_lane, max_lane_tile)
    if n_steps > 1 and n_steps % 2:
        n_steps += 1  # balanced split across v7x's two TensorCores
    tb = _round_up(pl.cdiv(b_lane, n_steps), LANE)
    return tb, n_steps * tb


def ddpg_actor_disc_forward(state, params, *, max_lane_tile=MAX_LANE_TILE,
                            feature_major_out=False):
    """state: (B, state_dim) f32; params: PyTorch-layout dict w1,b1,w2,b2,w3,b3.

    Returns softmax action probabilities of shape (B, action_dim)
    (or the raw (A_pad, B_pad) feature-major slab if feature_major_out=True).
    """
    B, S = state.shape
    A = params["w3"].shape[0]               # nn.Linear weight is (out, in)
    S_aug = _round_up(S + 1, 8)              # state rows + ones row, sublane aligned
    A_pad = _round_up(A, 8)
    augp = _round_up(HIDDEN + 1, 8)          # hidden + ones channel -> 24

    w1p, w2p, w3p = _pack_params(params, S, A, S_aug, A_pad, augp)

    TB, B_pad = _choose_batch_tile(B, max_lane_tile)

    # Feature-major state slab with the bias ("ones") row.  This is the one
    # remaining wrapper-side pass; it moves only ~2x the raw state bytes.
    x_t = (jnp.zeros((S_aug, B_pad), jnp.float32)
           .at[S, :].set(1.0)
           .at[:S, :B].set(state.T.astype(jnp.float32)))

    grid = (B_pad // TB,)

    out_t = pl.pallas_call(
        _ddpg_actor_kernel,
        out_shape=jax.ShapeDtypeStruct((A_pad, B_pad), jnp.float32),
        grid_spec=pltpu.PrefetchScalarGridSpec(
            num_scalar_prefetch=0,
            grid=grid,
            in_specs=[
                # Packed params: one full block each, constant index_map ->
                # DMA'd once, VMEM-resident across all batch tiles.
                pl.BlockSpec((augp, S_aug), lambda i: (0, 0)),
                pl.BlockSpec((augp, augp), lambda i: (0, 0)),
                pl.BlockSpec((A_pad, augp), lambda i: (0, 0)),
                # State tile: the gridded axis is the batch (lanes).
                pl.BlockSpec((S_aug, TB), lambda i: (0, i)),
            ],
            out_specs=pl.BlockSpec((A_pad, TB), lambda i: (0, i)),
        ),
        compiler_params=pltpu.CompilerParams(
            # Independent batch tiles -> megacore sharding on v7x.
            dimension_semantics=("parallel",),
        ),
    )(w1p, w2p, w3p, x_t)

    if feature_major_out:
        return out_t
    return out_t[:A, :B].T


# ---------------------------------------------------------------------------
# Parameter init (PyTorch nn.Linear layout: weight (out, in), bias (out,))
# ---------------------------------------------------------------------------
def init_params(key, state_dim, action_dim, hidden=HIDDEN):
    ks = jax.random.split(key, 6)

    def uinit(k, fan_in, shape):
        bound = 1.0 / jnp.sqrt(jnp.float32(fan_in))
        return jax.random.uniform(k, shape, jnp.float32, -bound, bound)

    return {
        "w1": uinit(ks[0], state_dim, (hidden, state_dim)),
        "b1": uinit(ks[1], state_dim, (hidden,)),
        "w2": uinit(ks[2], hidden, (hidden, hidden)),
        "b2": uinit(ks[3], hidden, (hidden,)),
        "w3": uinit(ks[4], hidden, (action_dim, hidden)),
        "b3": uinit(ks[5], hidden, (action_dim,)),
    }


def reference_forward(state, params):
    h1 = jnp.maximum(state @ params["w1"].T + params["b1"], 0.0)
    h2 = jnp.maximum(h1 @ params["w2"].T + params["b2"], 0.0)
    logits = h2 @ params["w3"].T + params["b3"]
    return jax.nn.softmax(logits, axis=1)


if __name__ == "__main__":
    key = jax.random.PRNGKey(0)
    k_state, k_params, k_state2 = jax.random.split(key, 3)

    state_dim = 4
    action_dim = 4
    params = init_params(k_params, state_dim, action_dim)

    # Small batch (single grid step; batch padded to one 128-lane tile).
    batch = 8
    state = jax.random.normal(k_state, (batch, state_dim), jnp.float32)
    out = jax.block_until_ready(ddpg_actor_disc_forward(state, params))
    ref = reference_forward(state, params)
    assert out.shape == (batch, action_dim)
    assert jnp.allclose(out, ref, atol=2e-3, rtol=2e-3)
    assert jnp.allclose(jnp.sum(out, axis=1), jnp.ones((batch,)), atol=1e-4)

    # Larger batch exercising the batch padding path.
    batch2 = 1500
    state2 = jax.random.normal(k_state2, (batch2, state_dim), jnp.float32)
    out2 = jax.block_until_ready(ddpg_actor_disc_forward(state2, params))
    ref2 = reference_forward(state2, params)
    assert out2.shape == (batch2, action_dim)
    assert jnp.allclose(out2, ref2, atol=2e-3, rtol=2e-3)

    print("KERNEL_OK")
</pallas_src>

<mosaic_0001>
module attributes {stable_mosaic.version = 11 : i64} {
  func.func @_ddpg_actor_kernel(%arg0: i32, %arg1: memref<24x8xf32, #tpu.memory_space<vmem>>, %arg2: memref<24x24xf32, #tpu.memory_space<vmem>>, %arg3: memref<8x24xf32, #tpu.memory_space<vmem>>, %arg4: memref<8x128xf32, #tpu.memory_space<vmem>>, %arg5: memref<8x128xf32, #tpu.memory_space<vmem>>) attributes {dimension_semantics = [#tpu.dimension_semantics<parallel>], iteration_bounds = array<i64: 1>, scalar_prefetch = 0 : i64, scratch_operands = 0 : i64, tpu.core_type = #tpu.core_type<tc>, window_params = [{pipeline_mode = #tpu.pipeline_mode<synchronous>, transform_indices = @transform_0, window_bounds = array<i64: 24, 8>}, {pipeline_mode = #tpu.pipeline_mode<synchronous>, transform_indices = @transform_1, window_bounds = array<i64: 24, 24>}, {pipeline_mode = #tpu.pipeline_mode<synchronous>, transform_indices = @transform_2, window_bounds = array<i64: 8, 24>}, {transform_indices = @transform_3, window_bounds = array<i64: 8, 128>}, {transform_indices = @transform_4, window_bounds = array<i64: 8, 128>}]} {
    %c0 = arith.constant 0 : index
    %c0_0 = arith.constant 0 : index
    %0 = vector.load %arg4[%c0, %c0_0] : memref<8x128xf32, #tpu.memory_space<vmem>>, vector<8x128xf32>
    %c0_1 = arith.constant 0 : index
    %c0_2 = arith.constant 0 : index
    %1 = vector.load %arg1[%c0_1, %c0_2] : memref<24x8xf32, #tpu.memory_space<vmem>>, vector<24x8xf32>
    %cst = arith.constant dense<0.000000e+00> : vector<24x128xf32>
    %2 = tpu.matmul %1, %0, %cst {dimension_numbers = #tpu.dot_dimension_numbers<[1], [0], [0], [1], [0, 0, 1, 1], [], []>} : vector<24x8xf32>, vector<8x128xf32>, vector<24x128xf32> -> vector<24x128xf32>
    %cst_3 = arith.constant 0.000000e+00 : f32
    %3 = vector.broadcast %cst_3 : f32 to vector<24x128xf32>
    %4 = arith.maximumf %2, %3 : vector<24x128xf32>
    %c0_4 = arith.constant 0 : index
    %c0_5 = arith.constant 0 : index
    %5 = vector.load %arg2[%c0_4, %c0_5] : memref<24x24xf32, #tpu.memory_space<vmem>>, vector<24x24xf32>
    %cst_6 = arith.constant dense<0.000000e+00> : vector<24x128xf32>
    %6 = tpu.matmul %5, %4, %cst_6 {dimension_numbers = #tpu.dot_dimension_numbers<[1], [0], [0], [1], [0, 0, 1, 1], [], []>} : vector<24x24xf32>, vector<24x128xf32>, vector<24x128xf32> -> vector<24x128xf32>
    %cst_7 = arith.constant 0.000000e+00 : f32
    %7 = vector.broadcast %cst_7 : f32 to vector<24x128xf32>
    %8 = arith.maximumf %6, %7 : vector<24x128xf32>
    %c0_8 = arith.constant 0 : index
    %c0_9 = arith.constant 0 : index
    %9 = vector.load %arg3[%c0_8, %c0_9] : memref<8x24xf32, #tpu.memory_space<vmem>>, vector<8x24xf32>
    %cst_10 = arith.constant dense<0.000000e+00> : vector<8x128xf32>
    %10 = tpu.matmul %9, %8, %cst_10 {dimension_numbers = #tpu.dot_dimension_numbers<[1], [0], [0], [1], [0, 0, 1, 1], [], []>} : vector<8x24xf32>, vector<24x128xf32>, vector<8x128xf32> -> vector<8x128xf32>
    %cst_11 = arith.constant dense<0xFF800000> : vector<128xf32>
    %11 = vector.multi_reduction <maximumf>, %10, %cst_11 [0] : vector<8x128xf32> to vector<128xf32>
    %12 = vector.shape_cast %11 : vector<128xf32> to vector<1x128xf32>
    %13 = vector.broadcast %12 : vector<1x128xf32> to vector<8x128xf32>
    %14 = arith.subf %10, %13 : vector<8x128xf32>
    %15 = math.exp %14 : vector<8x128xf32>
    %cst_12 = arith.constant dense<0.000000e+00> : vector<128xf32>
    %16 = vector.multi_reduction <add>, %15, %cst_12 [0] : vector<8x128xf32> to vector<128xf32>
    %17 = vector.shape_cast %16 : vector<128xf32> to vector<1x128xf32>
    %18 = tpu.reciprocal %17 : vector<1x128xf32> -> vector<1x128xf32>
    %19 = vector.broadcast %18 : vector<1x128xf32> to vector<8x128xf32>
    %20 = arith.mulf %15, %19 : vector<8x128xf32>
    %c0_13 = arith.constant 0 : index
    %c0_14 = arith.constant 0 : index
    %21 = vector.load %arg5[%c0_13, %c0_14] : memref<8x128xf32, #tpu.memory_space<vmem>>, vector<8x128xf32>
    tpu.vector_store %arg5[%c0_13, %c0_14], %20 {strides = array<i32>} : memref<8x128xf32, #tpu.memory_space<vmem>>, vector<8x128xf32>,
    return
  }
  func.func @transform_0(%arg0: i32) -> (i32, i32) {
    %c0_i32 = arith.constant 0 : i32
    %c0_i32_0 = arith.constant 0 : i32
    %c0_i32_1 = arith.constant 0 : i32
    return %c0_i32, %c0_i32_0 : i32, i32
  }
  func.func @transform_1(%arg0: i32) -> (i32, i32) {
    %c0_i32 = arith.constant 0 : i32
    %c0_i32_0 = arith.constant 0 : i32
    %c0_i32_1 = arith.constant 0 : i32
    return %c0_i32, %c0_i32_0 : i32, i32
  }
  func.func @transform_2(%arg0: i32) -> (i32, i32) {
    %c0_i32 = arith.constant 0 : i32
    %c0_i32_0 = arith.constant 0 : i32
    %c0_i32_1 = arith.constant 0 : i32
    return %c0_i32, %c0_i32_0 : i32, i32
  }
  func.func @transform_3(%arg0: i32) -> (i32, i32) {
    %c0_i32 = arith.constant 0 : i32
    %c0_i32_0 = arith.constant 0 : i32
    return %c0_i32, %arg0 : i32, i32
  }
  func.func @transform_4(%arg0: i32) -> (i32, i32) {
    %c0_i32 = arith.constant 0 : i32
    %c0_i32_0 = arith.constant 0 : i32
    return %c0_i32, %arg0 : i32, i32
  }
}

</mosaic_0001>

<llo_original>
// kernel: tpu_custom_call.1
$region0: #{tpu_custom_call.1}
  #allocation0 [shape = 'u32[]', space=smem, size = 0x4, offset = 0x4, fixed_abs, tag = 'smem constant byte address 0x4 - core index']
  #allocation1 [shape = 'u32[144,128]{1,0:T(1,128)}', space=vmem, size = 0x12000, scoped, tag = 'internal scratch']
  %s0 = inlined_call_operand.vmem [shape: f32[24,8], index: 0, kind: input, shape index: {}]
  %s1 = inlined_call_operand.vmem [shape: f32[24,24], index: 1, kind: input, shape index: {}]
  %s2 = inlined_call_operand.vmem [shape: f32[8,24], index: 2, kind: input, shape index: {}]
  %s3 = inlined_call_operand.vmem [shape: f32[8,128], index: 3, kind: input, shape index: {}]
  %s4 = inlined_call_operand.hbm [shape: f32[8,128], index: 4, kind: output, shape index: {}]
  %s5 = sld [smem:[#allocation0]]
  $region26: #{tpu_custom_call.1} parent=0
    _
  %s7 = ssub.s32 1, %s5
  %s8 = scalar_select 0, %s7, %s5
  $region1: #{tpu_custom_call.1} parent=0
    #allocation2 [shape = 'u8[4096]{0}', space=vmem, size = 0x1000, scoped, tag = 'output window, operand 0, single buffered']
    #allocation3 [shape = 's32[1]{0}', space=sflag, size = 0x4, scoped, tag = 'scoped memory for tpu_custom_call.1']
    %9 = vsyncpa [#allocation3], 0
    // Predicated region
    $region2: #{tpu_custom_call.1} parent=1 // pred_check
      _
    $region3: #{tpu_custom_call.1} parent=1 // pred_check_branch
      %11 = sbr.rel (0) target = $region5
    $region4: #{tpu_custom_call.1} parent=1 // pred_region
      _
    $region5: #{tpu_custom_call.1} parent=1 // pred_fallthru
      _
    // Predicated region
    $region6: #{tpu_custom_call.1} parent=1 // pred_check
      _
    $region7: #{tpu_custom_call.1} parent=1 // pred_check_branch
      %13 = sbr.rel (0) target = $region9
    $region8: #{tpu_custom_call.1} parent=1 // pred_region
      _
    $region9: #{tpu_custom_call.1} parent=1 // pred_fallthru
      _
    // Predicated region
    $region10: #{tpu_custom_call.1} parent=1 // pred_check
      _
    $region11: #{tpu_custom_call.1} parent=1 // pred_check_branch
      %15 = sbr.rel (0) target = $region13
    $region12: #{tpu_custom_call.1} parent=1 // pred_region
      _
    $region13: #{tpu_custom_call.1} parent=1 // pred_fallthru
      _
    // Predicated region
    $region14: #{tpu_custom_call.1} parent=1 // pred_check
      _
    $region15: #{tpu_custom_call.1} parent=1 // pred_check_branch
      %17 = sbr.rel (0) target = $region17
    $region16: #{tpu_custom_call.1} parent=1 // pred_region
      _
    $region17: #{tpu_custom_call.1} parent=1 // pred_fallthru
      _
    %v18 = vld [vmem:[%s3] sm:$0xff]
    %v19 = vld [vmem:[%s0] sm:$0xff]
    %v20 = vld [vmem:[%s0 + $0x8] sm:$0xff]
    %v21 = vld [vmem:[%s0 + $0x10] sm:$0xff]
    %vm22 = vcmask 64512
    %v24 = vsel %vm22, %v19, 0
    %v27 = vsel %vm22, %v20, 0
    %v30 = vsel %vm22, %v21, 0
    %32 = vmatprep.subr.mxu0 0.0
    %33 = vmatpush1.msra.mxu0 %v18
    %34 = vmatprep.subr.mxu0 0.0
    %35 = vmatpush1.msra.mxu0 0.0
    %36 = vmatprep.subr.mxu0 0.0
    %37 = vmatpush1.msra.mxu0 0.0
    %38 = vmatprep.subr.mxu0 0.0
    %39 = vmatpush1.msra.mxu0 0.0
    %40 = vmatprep.subr.mxu0 0.0
    %41 = vmatpush1.msra.mxu0 0.0
    %42 = vmatprep.subr.mxu0 0.0
    %43 = vmatpush1.msra.mxu0 0.0
    %44 = vmatprep.subr.mxu0 0.0
    %45 = vmatpush1.msra.mxu0 0.0
    %46 = vmatprep.subr.mxu0 0.0
    %47 = vmatpush1.msra.mxu0 0.0
    %48 = vmatprep.subr.mxu0 0.0
    %49 = vmatpush1.msra.mxu0 0.0
    %50 = vmatprep.subr.mxu0 0.0
    %51 = vmatpush1.msra.mxu0 0.0
    %52 = vmatprep.subr.mxu0 0.0
    %53 = vmatpush1.msra.mxu0 0.0
    %54 = vmatprep.subr.mxu0 0.0
    %55 = vmatpush1.msra.mxu0 0.0
    %56 = vmatprep.subr.mxu0 0.0
    %57 = vmatpush1.msra.mxu0 0.0
    %58 = vmatprep.subr.mxu0 0.0
    %59 = vmatpush1.msra.mxu0 0.0
    %60 = vmatprep.subr.mxu0 0.0
    %61 = vmatpush1.msra.mxu0 0.0
    %62 = vmatprep.subr.mxu0 0.0
    %63 = vmatpush1.msra.mxu0 0.0
    %64 = vmatprep.subr.mxu0 0.0
    %65 = vmatpush1.msra.mxu0 0.0
    %66 = vmatprep.subr.mxu0 0.0
    %67 = vmatpush1.msra.mxu0 0.0
    %68 = vmatprep.subr.mxu0 0.0
    %69 = vmatpush1.msra.mxu0 0.0
    %70 = vmatprep.subr.mxu0 0.0
    %71 = vmatpush1.msra.mxu0 0.0
    %72 = vmatprep.subr.mxu0 0.0
    %73 = vmatpush1.msra.mxu0 0.0
    %74 = vmatprep.subr.mxu0 0.0
    %75 = vmatpush1.msra.mxu0 0.0
    %76 = vmatprep.subr.mxu0 0.0
    %77 = vmatpush1.msra.mxu0 0.0
    %78 = vmatprep.subr.mxu0 0.0
    %79 = vmatpush1.msra.mxu0 0.0
    %80 = vmatprep.subr.mxu0 0.0
    %81 = vmatpush1.msra.mxu0 0.0
    %82 = vmatprep.subr.mxu0 0.0
    %83 = vmatpush1.msra.mxu0 0.0
    %84 = vmatprep.subr.mxu0 0.0
    %85 = vmatpush1.msra.mxu0 0.0
    %86 = vmatprep.subr.mxu0 0.0
    %87 = vmatpush1.msra.mxu0 0.0
    %88 = vmatprep.subr.mxu0 0.0
    %89 = vmatpush1.msra.mxu0 0.0
    %90 = vmatprep.subr.mxu0 0.0
    %91 = vmatpush1.msra.mxu0 0.0
    %92 = vmatprep.subr.mxu0 0.0
    %93 = vmatpush1.msra.mxu0 0.0
    %94 = vmatprep.subr.mxu0 0.0
    %95 = vmatpush1.msra.mxu0 0.0
    %96 = vmatprep.mubr.f32.mxu0 0.0
    %97 = vmatmul.mubr.f32.gmra.mrb[0].mxu0 %v24
    %v98 = vpop.f32.mrb[0].mxu0
    %v99 = vadd.f32 0.0, %v98
    %v100 = vpop.f32.mrb[0].mxu0
    %101 = vmatprep.mubr.f32.mxu0 0.0
    %102 = vmatmul.mubr.f32.gmra.mrb[0].mxu0 %v27
    %v103 = vpop.f32.mrb[0].mxu0
    %v104 = vadd.f32 0.0, %v103
    %v105 = vpop.f32.mrb[0].mxu0
    %106 = vmatprep.mubr.f32.mxu0 0.0
    %107 = vmatmul.mubr.f32.gmra.mrb[0].mxu0 %v30
    %v108 = vpop.f32.mrb[0].mxu0
    %v109 = vadd.f32 0.0, %v108
    %v110 = vpop.f32.mrb[0].mxu0
    %111 = vdwg.mxu0
    %v112 = vmax.f32 %v99, 0.0
    %v113 = vmax.f32 %v104, 0.0
    %v114 = vmax.f32 %v109, 0.0
    %v115 = vld [vmem:[%s1] sm:$0xff]
    %v116 = vld [vmem:[%s1 + $0x8] sm:$0xff]
    %v117 = vld [vmem:[%s1 + $0x10] sm:$0xff]
    %vm118 = vcmask 195584
    %v120 = vsel %vm118, %v115, 0
    %v123 = vsel %vm118, %v116, 0
    %v126 = vsel %vm118, %v117, 0
    %128 = vmatprep.subr.mxu0 0.0
    %129 = vmatpush1.msra.mxu0 %v112
    %130 = vmatprep.subr.mxu0 0.0
    %131 = vmatpush1.msra.mxu0 %v113
    %132 = vmatprep.subr.mxu0 0.0
    %133 = vmatpush1.msra.mxu0 %v114
    %134 = vmatprep.subr.mxu0 0.0
    %135 = vmatpush1.msra.mxu0 0.0
    %136 = vmatprep.subr.mxu0 0.0
    %137 = vmatpush1.msra.mxu0 0.0
    %138 = vmatprep.subr.mxu0 0.0
    %139 = vmatpush1.msra.mxu0 0.0
    %140 = vmatprep.subr.mxu0 0.0
    %141 = vmatpush1.msra.mxu0 0.0
    %142 = vmatprep.subr.mxu0 0.0
    %143 = vmatpush1.msra.mxu0 0.0
    %144 = vmatprep.subr.mxu0 0.0
    %145 = vmatpush1.msra.mxu0 0.0
    %146 = vmatprep.subr.mxu0 0.0
    %147 = vmatpush1.msra.mxu0 0.0
    %148 = vmatprep.subr.mxu0 0.0
    %149 = vmatpush1.msra.mxu0 0.0
    %150 = vmatprep.subr.mxu0 0.0
    %151 = vmatpush1.msra.mxu0 0.0
    %152 = vmatprep.subr.mxu0 0.0
    %153 = vmatpush1.msra.mxu0 0.0
    %154 = vmatprep.subr.mxu0 0.0
    %155 = vmatpush1.msra.mxu0 0.0
    %156 = vmatprep.subr.mxu0 0.0
    %157 = vmatpush1.msra.mxu0 0.0
    %158 = vmatprep.subr.mxu0 0.0
    %159 = vmatpush1.msra.mxu0 0.0
    %160 = vmatprep.subr.mxu0 0.0
    %161 = vmatpush1.msra.mxu0 0.0
    %162 = vmatprep.subr.mxu0 0.0
    %163 = vmatpush1.msra.mxu0 0.0
    %164 = vmatprep.subr.mxu0 0.0
    %165 = vmatpush1.msra.mxu0 0.0
    %166 = vmatprep.subr.mxu0 0.0
    %167 = vmatpush1.msra.mxu0 0.0
    %168 = vmatprep.subr.mxu0 0.0
    %169 = vmatpush1.msra.mxu0 0.0
    %170 = vmatprep.subr.mxu0 0.0
    %171 = vmatpush1.msra.mxu0 0.0
    %172 = vmatprep.subr.mxu0 0.0
    %173 = vmatpush1.msra.mxu0 0.0
    %174 = vmatprep.subr.mxu0 0.0
    %175 = vmatpush1.msra.mxu0 0.0
    %176 = vmatprep.subr.mxu0 0.0
    %177 = vmatpush1.msra.mxu0 0.0
    %178 = vmatprep.subr.mxu0 0.0
    %179 = vmatpush1.msra.mxu0 0.0
    %180 = vmatprep.subr.mxu0 0.0
    %181 = vmatpush1.msra.mxu0 0.0
    %182 = vmatprep.subr.mxu0 0.0
    %183 = vmatpush1.msra.mxu0 0.0
    %184 = vmatprep.subr.mxu0 0.0
    %185 = vmatpush1.msra.mxu0 0.0
    %186 = vmatprep.subr.mxu0 0.0
    %187 = vmatpush1.msra.mxu0 0.0
    %188 = vmatprep.subr.mxu0 0.0
    %189 = vmatpush1.msra.mxu0 0.0
    %190 = vmatprep.subr.mxu0 0.0
    %191 = vmatpush1.msra.mxu0 0.0
    %192 = vmatprep.mubr.f32.mxu0 0.0
    %193 = vmatmul.mubr.f32.gmra.mrb[0].mxu0 %v120
    %v194 = vpop.f32.mrb[0].mxu0
    %v195 = vadd.f32 0.0, %v194
    %v196 = vpop.f32.mrb[0].mxu0
    %197 = vmatprep.mubr.f32.mxu0 0.0
    %198 = vmatmul.mubr.f32.gmra.mrb[0].mxu0 %v123
    %v199 = vpop.f32.mrb[0].mxu0
    %v200 = vadd.f32 0.0, %v199
    %v201 = vpop.f32.mrb[0].mxu0
    %202 = vmatprep.mubr.f32.mxu0 0.0
    %203 = vmatmul.mubr.f32.gmra.mrb[0].mxu0 %v126
    %v204 = vpop.f32.mrb[0].mxu0
    %v205 = vadd.f32 0.0, %v204
    %v206 = vpop.f32.mrb[0].mxu0
    %207 = vdwg.mxu0
    %v208 = vmax.f32 %v195, 0.0
    %v209 = vmax.f32 %v200, 0.0
    %v210 = vmax.f32 %v205, 0.0
    %v211 = vld [vmem:[%s2] sm:$0xff]
    %v213 = vsel %vm118, %v211, 0
    %215 = vmatprep.subr.mxu0 0.0
    %216 = vmatpush1.msra.mxu0 %v208
    %217 = vmatprep.subr.mxu0 0.0
    %218 = vmatpush1.msra.mxu0 %v209
    %219 = vmatprep.subr.mxu0 0.0
    %220 = vmatpush1.msra.mxu0 %v210
    %221 = vmatprep.subr.mxu0 0.0
    %222 = vmatpush1.msra.mxu0 0.0
    %223 = vmatprep.subr.mxu0 0.0
    %224 = vmatpush1.msra.mxu0 0.0
    %225 = vmatprep.subr.mxu0 0.0
    %226 = vmatpush1.msra.mxu0 0.0
    %227 = vmatprep.subr.mxu0 0.0
    %228 = vmatpush1.msra.mxu0 0.0
    %229 = vmatprep.subr.mxu0 0.0
    %230 = vmatpush1.msra.mxu0 0.0
    %231 = vmatprep.subr.mxu0 0.0
    %232 = vmatpush1.msra.mxu0 0.0
    %233 = vmatprep.subr.mxu0 0.0
    %234 = vmatpush1.msra.mxu0 0.0
    %235 = vmatprep.subr.mxu0 0.0
    %236 = vmatpush1.msra.mxu0 0.0
    %237 = vmatprep.subr.mxu0 0.0
    %238 = vmatpush1.msra.mxu0 0.0
    %239 = vmatprep.subr.mxu0 0.0
    %240 = vmatpush1.msra.mxu0 0.0
    %241 = vmatprep.subr.mxu0 0.0
    %242 = vmatpush1.msra.mxu0 0.0
    %243 = vmatprep.subr.mxu0 0.0
    %244 = vmatpush1.msra.mxu0 0.0
    %245 = vmatprep.subr.mxu0 0.0
    %246 = vmatpush1.msra.mxu0 0.0
    %247 = vmatprep.subr.mxu0 0.0
    %248 = vmatpush1.msra.mxu0 0.0
    %249 = vmatprep.subr.mxu0 0.0
    %250 = vmatpush1.msra.mxu0 0.0
    %251 = vmatprep.subr.mxu0 0.0
    %252 = vmatpush1.msra.mxu0 0.0
    %253 = vmatprep.subr.mxu0 0.0
    %254 = vmatpush1.msra.mxu0 0.0
    %255 = vmatprep.subr.mxu0 0.0
    %256 = vmatpush1.msra.mxu0 0.0
    %257 = vmatprep.subr.mxu0 0.0
    %258 = vmatpush1.msra.mxu0 0.0
    %259 = vmatprep.subr.mxu0 0.0
    %260 = vmatpush1.msra.mxu0 0.0
    %261 = vmatprep.subr.mxu0 0.0
    %262 = vmatpush1.msra.mxu0 0.0
    %263 = vmatprep.subr.mxu0 0.0
    %264 = vmatpush1.msra.mxu0 0.0
    %265 = vmatprep.subr.mxu0 0.0
    %266 = vmatpush1.msra.mxu0 0.0
    %267 = vmatprep.subr.mxu0 0.0
    %268 = vmatpush1.msra.mxu0 0.0
    %269 = vmatprep.subr.mxu0 0.0
    %270 = vmatpush1.msra.mxu0 0.0
    %271 = vmatprep.subr.mxu0 0.0
    %272 = vmatpush1.msra.mxu0 0.0
    %273 = vmatprep.subr.mxu0 0.0
    %274 = vmatpush1.msra.mxu0 0.0
    %275 = vmatprep.subr.mxu0 0.0
    %276 = vmatpush1.msra.mxu0 0.0
    %277 = vmatprep.subr.mxu0 0.0
    %278 = vmatpush1.msra.mxu0 0.0
    %279 = vmatprep.mubr.f32.mxu0 0.0
    %280 = vmatmul.mubr.f32.gmra.mrb[0].mxu0 %v213
    %v281 = vpop.f32.mrb[0].mxu0
    %v282 = vadd.f32 0.0, %v281
    %v283 = vpop.f32.mrb[0].mxu0
    %284 = vdwg.mxu0
    %v285 = vrot.slane %v282, 4
    %v286 = vmax.f32 %v282, %v285
    %v287 = vrot.slane %v286, 2
    %v288 = vmax.f32 %v286, %v287
    %v289 = vrot.slane %v288, 1
    %v290 = vmax.f32 %v288, %v289
    %v291 = vsub.f32 %v282, %v290
    %v292 = vmul.f32 %v291, 1.442695
    %v293 = vpow.pop %v292
    %v294 = vrot.slane %v293, 4
    %v295 = vadd.f32 %v293, %v294
    %v296 = vrot.slane %v295, 2
    %v297 = vadd.f32 %v295, %v296
    %v298 = vrot.slane %v297, 1
    %v299 = vadd.f32 %v297, %v298
    %v300 = vrcp.pop %v299
    %v301 = vmul.f32 %v293, %v300
    %302 = vst [vmem:[#allocation2] sm:$0xff] %v301
    // Predicated region
    $region18: #{tpu_custom_call.1} parent=1 // pred_check
      _
    $region19: #{tpu_custom_call.1} parent=1 // pred_check_branch
      %304 = sbr.rel (0) target = $region21
    $region20: #{tpu_custom_call.1} parent=1 // pred_region
      %s306 = ssub.s32 128, 128
      %307 = vsyncadd [#allocation3], %s306
      %s309 = sshll.u32 [#allocation2], 4
      %s310 = int_to_ptr.vmem [resolvable:$true] %s309
      %312 = dma.vmem_to_hbm [thread:$0]  %s310, 128, %s4, [#allocation3]
    $region21: #{tpu_custom_call.1} parent=1 // pred_fallthru
      _
    // Predicated region
    $region22: #{tpu_custom_call.1} parent=1 // pred_check
      _
    $region23: #{tpu_custom_call.1} parent=1 // pred_check_branch
      %314 = sbr.rel (0) target = $region25
    $region24: #{tpu_custom_call.1} parent=1 // pred_region
      %315 = dma.done [#allocation3], 128
    $region25: #{tpu_custom_call.1} parent=1 // pred_fallthru
      _
    %316 = vsyncpa [#allocation3], 1

</llo_original>
